<compile_context>
chip_gen: v6e
topology: v6e:2x2x1
jax: 0.10.0
libtpu: 0.0.40
codegen_flags: <defaults>
</compile_context>

<pallas_src>
import functools

import jax
import jax.numpy as jnp
from jax.experimental import pallas as pl
from jax.experimental.pallas import tpu as pltpu


def _round_up(x, m):
    return ((x + m - 1) // m) * m


def _pick_tm(M, target):
    """M-tile: multiple of 16 (bf16 sublane packing), ideally a divisor of M
    (so the trailing slice is a no-op bitcast), capped at `target`."""
    if M <= target:
        return _round_up(M, 16)
    for cand in range(target, 15, -16):      # largest divisor of M <= target
        if M % cand == 0:
            return cand
    return target                            # no divisor found -> pad M


def _patch_embed_kernel(x_ref, w_ref, b_ref, o_ref):
    # x_ref: (tm, K) bf16 patch rows (streamed);
    # w_ref: (K, E_pad) bf16 weight (VMEM-resident, fetched once);
    # b_ref: (1, E_pad) f32 bias  (VMEM-resident).
    acc = jnp.dot(x_ref[...], w_ref[...], preferred_element_type=jnp.float32)
    o_ref[...] = (acc + b_ref[...]).astype(o_ref.dtype)


@functools.partial(jax.jit, static_argnames=("patch_size", "out_dtype", "tm_target"))
def patch_embedding(x, weight, bias, patch_size, out_dtype=None, tm_target=512):
    """x: (B, C, H, W) NCHW.  weight: (E, C, P, P) Conv2d weight.  bias: (E,).
    Returns (B, num_patches, E) == conv2d(x).flatten(2).transpose(1, 2).
    out_dtype defaults to x.dtype (module semantics); pass jnp.bfloat16 to
    halve the output HBM stream when feeding bf16 downstream layers."""
    B, C, H, W = x.shape
    E = weight.shape[0]
    P = patch_size
    Hp, Wp = H // P, W // P
    Np = Hp * Wp
    K = C * P * P
    M = B * Np
    out_dtype = x.dtype if out_dtype is None else jnp.dtype(out_dtype)

    # ---- glue: patch extraction (pure layout; offered to XLA for fusion into
    #      the pallas_call prologue via allow_input_fusion).  Cast to bf16
    #      first so the transpose/pad move half the bytes when x is f32. ----
    # (B, C, Hp, P, Wp, P) -> (B, Hp, Wp, C, P, P) -> (M, K)  [(c, ph, pw) order]
    patches = (x.astype(jnp.bfloat16)
               .reshape(B, C, Hp, P, Wp, P)
               .transpose(0, 2, 4, 1, 3, 5)
               .reshape(M, K))
    # Conv2d weight (E, C, P, P) -> (K, E), same (c, ph, pw) flattening order.
    w_mat = weight.reshape(E, K).T.astype(jnp.bfloat16)

    # ---- tiling: lane-dense E padded only to 128; weight fully resident;
    #      1-D grid over M with big tiles sized against the VMEM budget ----
    E_pad = _round_up(E, 128)
    out_itemsize = jnp.dtype(out_dtype).itemsize

    def tile_bytes(t):
        # double-buffered streamed input/output, resident weight/bias
        # (counted x2 to stay conservative about buffer allocation).
        return (2 * t * K * 2            # patches tiles (bf16)
                + 2 * K * E_pad * 2      # weight (bf16, resident)
                + 2 * 1 * E_pad * 4      # bias row (f32)
                + 2 * t * E_pad * out_itemsize)   # output tiles

    target = int(tm_target)
    while target > 64 and tile_bytes(target) > 40 * 1024 * 1024:
        target //= 2                     # keep v7x (64 MiB physical) safe
    tm = _pick_tm(M, target)
    M_pad = _round_up(M, tm)

    if M_pad != M:
        patches = jnp.pad(patches, ((0, M_pad - M), (0, 0)))
    if E_pad != E:
        w_mat = jnp.pad(w_mat, ((0, 0), (0, E_pad - E)))
        bias = jnp.pad(bias, (0, E_pad - E))
    b_row = bias.reshape(1, E_pad).astype(jnp.float32)

    grid = (M_pad // tm,)
    vmem_limit = min(48 * 1024 * 1024,
                     max(16 * 1024 * 1024, 2 * tile_bytes(tm)))

    cost = pl.CostEstimate(
        flops=2 * M_pad * K * E_pad,
        transcendentals=0,
        bytes_accessed=(M_pad * K * 2            # patches streamed once (bf16)
                        + K * E_pad * 2          # weight fetched once (resident)
                        + E_pad * 4              # bias
                        + M_pad * E_pad * out_itemsize),   # output written once
    )

    out = pl.pallas_call(
        _patch_embed_kernel,
        out_shape=jax.ShapeDtypeStruct((M_pad, E_pad), out_dtype),
        grid_spec=pltpu.PrefetchScalarGridSpec(
            num_scalar_prefetch=0,
            grid=grid,
            in_specs=[
                pl.BlockSpec((tm, K), lambda i: (i, 0)),     # patch rows stream
                pl.BlockSpec((K, E_pad), lambda i: (0, 0)),  # weight, resident
                pl.BlockSpec((1, E_pad), lambda i: (0, 0)),  # bias, resident
            ],
            out_specs=pl.BlockSpec((tm, E_pad), lambda i: (i, 0)),
        ),
        compiler_params=pltpu.CompilerParams(
            dimension_semantics=("parallel",),   # v7x: shard M tiles across TCs
            vmem_limit_bytes=vmem_limit,
            allow_input_fusion=[True, True, True],
        ),
        cost_estimate=cost,
    )(patches, w_mat, b_row)

    # Drop padding rows/cols (no-op when tm | M and E % 128 == 0) and restore
    # (B, Np, E).
    if M_pad != M or E_pad != E:
        out = out[:M, :E]
    return out.reshape(B, Np, E)


if __name__ == "__main__":
    # Shapes consistent with the module:
    # image_size=16, patch_size=4, input_channels=4, embedding_dimension=32
    B, C, H, W = 2, 4, 16, 16
    P = 4
    E = 32
    Np = (H // P) * (W // P)

    key = jax.random.PRNGKey(0)
    kx, kw, kb = jax.random.split(key, 3)

    x = jax.random.normal(kx, (B, C, H, W), dtype=jnp.float32)
    # Synthetic deterministic parameters (Conv2d weight shape (E, C, P, P)).
    weight = jax.random.normal(kw, (E, C, P, P), dtype=jnp.float32) * 0.02
    bias = jax.random.normal(kb, (E,), dtype=jnp.float32) * 0.02

    out = patch_embedding(x, weight, bias, P)
    out = jax.block_until_ready(out)
    assert out.shape == (B, Np, E), out.shape

    # Cross-check against plain-JAX conv reference (same semantics as nn.Conv2d).
    ref = jax.lax.conv_general_dilated(
        x, weight, window_strides=(P, P), padding="VALID",
        dimension_numbers=("NCHW", "OIHW", "NCHW"))
    ref = ref + bias.reshape(1, E, 1, 1)
    ref = ref.reshape(B, E, Np).transpose(0, 2, 1)
    # Tolerance loosened vs the f32 reference because the MXU operands are bf16
    # (accumulation is still f32).
    err = float(jnp.max(jnp.abs(out - ref)))
    assert jnp.allclose(out, ref, atol=2e-2, rtol=2e-2), err

    print("KERNEL_OK")
</pallas_src>

<mosaic_0001>
module attributes {stable_mosaic.version = 11 : i64} {
  func.func @_patch_embed_kernel(%arg0: i32, %arg1: memref<32x64xbf16, #tpu.memory_space<vmem>>, %arg2: memref<64x128xbf16, #tpu.memory_space<vmem>>, %arg3: memref<1x128xf32, #tpu.memory_space<vmem>>, %arg4: memref<32x128xf32, #tpu.memory_space<vmem>>) attributes {dimension_semantics = [#tpu.dimension_semantics<parallel>], iteration_bounds = array<i64: 1>, scalar_prefetch = 0 : i64, scratch_operands = 0 : i64, tpu.core_type = #tpu.core_type<tc>, window_params = [{transform_indices = @transform_0, window_bounds = array<i64: 32, 64>}, {pipeline_mode = #tpu.pipeline_mode<synchronous>, transform_indices = @transform_1, window_bounds = array<i64: 64, 128>}, {pipeline_mode = #tpu.pipeline_mode<synchronous>, transform_indices = @transform_2, window_bounds = array<i64: 1, 128>}, {transform_indices = @transform_3, window_bounds = array<i64: 32, 128>}]} {
    %c0 = arith.constant 0 : index
    %c0_0 = arith.constant 0 : index
    %0 = vector.load %arg1[%c0, %c0_0] : memref<32x64xbf16, #tpu.memory_space<vmem>>, vector<32x64xbf16>
    %c0_1 = arith.constant 0 : index
    %c0_2 = arith.constant 0 : index
    %1 = vector.load %arg2[%c0_1, %c0_2] : memref<64x128xbf16, #tpu.memory_space<vmem>>, vector<64x128xbf16>
    %cst = arith.constant dense<0.000000e+00> : vector<32x128xf32>
    %2 = tpu.matmul %0, %1, %cst {dimension_numbers = #tpu.dot_dimension_numbers<[1], [0], [0], [1], [0, 0, 1, 1], [], []>} : vector<32x64xbf16>, vector<64x128xbf16>, vector<32x128xf32> -> vector<32x128xf32>
    %c0_3 = arith.constant 0 : index
    %c0_4 = arith.constant 0 : index
    %3 = vector.load %arg3[%c0_3, %c0_4] : memref<1x128xf32, #tpu.memory_space<vmem>>, vector<1x128xf32>
    %4 = vector.broadcast %3 : vector<1x128xf32> to vector<32x128xf32>
    %5 = arith.addf %2, %4 : vector<32x128xf32>
    %c0_5 = arith.constant 0 : index
    %c0_6 = arith.constant 0 : index
    %6 = vector.load %arg4[%c0_5, %c0_6] : memref<32x128xf32, #tpu.memory_space<vmem>>, vector<32x128xf32>
    tpu.vector_store %arg4[%c0_5, %c0_6], %5 {strides = array<i32>} : memref<32x128xf32, #tpu.memory_space<vmem>>, vector<32x128xf32>,
    return
  }
  func.func @transform_0(%arg0: i32) -> (i32, i32) {
    %c0_i32 = arith.constant 0 : i32
    %c0_i32_0 = arith.constant 0 : i32
    return %arg0, %c0_i32 : i32, i32
  }
  func.func @transform_1(%arg0: i32) -> (i32, i32) {
    %c0_i32 = arith.constant 0 : i32
    %c0_i32_0 = arith.constant 0 : i32
    %c0_i32_1 = arith.constant 0 : i32
    return %c0_i32, %c0_i32_0 : i32, i32
  }
  func.func @transform_2(%arg0: i32) -> (i32, i32) {
    %c0_i32 = arith.constant 0 : i32
    %c0_i32_0 = arith.constant 0 : i32
    %c0_i32_1 = arith.constant 0 : i32
    return %c0_i32, %c0_i32_0 : i32, i32
  }
  func.func @transform_3(%arg0: i32) -> (i32, i32) {
    %c0_i32 = arith.constant 0 : i32
    %c0_i32_0 = arith.constant 0 : i32
    return %arg0, %c0_i32 : i32, i32
  }
}

</mosaic_0001>

<llo_original>
// kernel: patch_embedding.2
$region0: #{patch_embedding.2}
  #allocation0 [shape = 'u32[]', space=smem, size = 0x4, offset = 0x4, fixed_abs, tag = 'smem constant byte address 0x4 - core index']
  #allocation1 [shape = 'u32[144,128]{1,0:T(1,128)}', space=vmem, size = 0x12000, scoped, tag = 'internal scratch']
  #allocation2 [shape = 'u32[2048]{0}', space=vmem, size = 0x2000, scoped, tag = 'scoped memory for patch_embedding.2']
  #allocation3 [shape = 'u32[2048]{0}', space=vmem, size = 0x2000, scoped, tag = 'scoped memory for patch_embedding.2']
  #allocation4 [shape = 'u32[2048]{0}', space=vmem, size = 0x2000, scoped, tag = 'scoped memory for patch_embedding.2']
  #allocation5 [shape = 'u32[2048]{0}', space=vmem, size = 0x2000, scoped, tag = 'scoped memory for patch_embedding.2']
  #allocation6 [shape = 'u32[2048]{0}', space=vmem, size = 0x2000, scoped, tag = 'scoped memory for patch_embedding.2']
  #allocation7 [shape = 'u32[2048]{0}', space=vmem, size = 0x2000, scoped, tag = 'scoped memory for patch_embedding.2']
  #allocation8 [shape = 'u32[2048]{0}', space=vmem, size = 0x2000, scoped, tag = 'scoped memory for patch_embedding.2']
  #allocation9 [shape = 'u32[2048]{0}', space=vmem, size = 0x2000, scoped, tag = 'scoped memory for patch_embedding.2']
  #allocation10 [shape = 'u32[2048]{0}', space=vmem, size = 0x2000, scoped, tag = 'scoped memory for patch_embedding.2']
  #allocation11 [shape = 'u32[2048]{0}', space=vmem, size = 0x2000, scoped, tag = 'scoped memory for patch_embedding.2']
  %s0 = inlined_call_operand.vmem [shape: bf16[32,64], index: 0, kind: input, shape index: {}]
  %s1 = inlined_call_operand.vmem [shape: bf16[64,32], index: 1, kind: input, shape index: {}]
  %s2 = inlined_call_operand.<no memory space> [shape: bf16[], index: 2, kind: input, shape index: {}]
  %s3 = inlined_call_operand.vmem [shape: f32[32], index: 3, kind: input, shape index: {}]
  %s4 = inlined_call_operand.<no memory space> [shape: f32[], index: 4, kind: input, shape index: {}]
  %s5 = inlined_call_operand.hbm [shape: f32[32,128], index: 5, kind: output, shape index: {}]
  %s6 = sld [smem:[#allocation0]]
  $region22: #{patch_embedding.2} parent=0
    _
  %s8 = ssub.s32 1, %s6
  %s9 = scalar_select 0, %s8, %s6
  %v10 = vstv %s2
  %v11 = vunpack.i.l.bf16 %v10
  %v13 = vunpack.i.h.bf16 %v10
  %v15 = vstv %s4
  $region1: #{patch_embedding.2} parent=0
    #allocation12 [shape = 'u8[16384]{0}', space=vmem, size = 0x4000, scoped, tag = 'output window, operand 0, single buffered']
    #allocation13 [shape = 's32[1]{0}', space=sflag, size = 0x4, scoped, tag = 'scoped memory for patch_embedding.2']
    #allocation14 [shape = 'u8[16384]{0}', space=vmem, size = 0x4000, dematerialized = true, scoped, tag = 'FusionAdapter Buffer %fusion.1 = bf16[64,128]{1,0:T(8,128)(2,1)} fusion(%param_1.3, %param_2.2), kind=kLoop, calls=%fused_computation.2.clone, metadata={op_name="jit(patch_embedding)/jit(_pad)/pad" stack_frame_id=12}']
    #allocation15 [shape = 'u8[512]{0}', space=vmem, size = 0x400, dematerialized = true, scoped, tag = 'FusionAdapter Buffer %fusion.2 = f32[1,128]{1,0:T(1,128)} fusion(%param_3.2, %param_4), kind=kLoop, calls=%fused_computation.3.clone, metadata={op_name="jit(patch_embedding)/reshape" stack_frame_id=14}']
    %16 = vsyncpa [#allocation13], 0
    // Predicated region
    $region2: #{patch_embedding.2} parent=1 // pred_check
      _
    $region3: #{patch_embedding.2} parent=1 // pred_check_branch
      %18 = sbr.rel (0) target = $region5
    $region4: #{patch_embedding.2} parent=1 // pred_region
      _
    $region5: #{patch_embedding.2} parent=1 // pred_fallthru
      _
    // Predicated region
    $region6: #{patch_embedding.2} parent=1 // pred_check
      _
    $region7: #{patch_embedding.2} parent=1 // pred_check_branch
      %20 = sbr.rel (0) target = $region9
    $region8: #{patch_embedding.2} parent=1 // pred_region
      _
    $region9: #{patch_embedding.2} parent=1 // pred_fallthru
      _
    // Predicated region
    $region10: #{patch_embedding.2} parent=1 // pred_check
      _
    $region11: #{patch_embedding.2} parent=1 // pred_check_branch
      %22 = sbr.rel (0) target = $region13
    $region12: #{patch_embedding.2} parent=1 // pred_region
      _
    $region13: #{patch_embedding.2} parent=1 // pred_fallthru
      _
    %s24 = sor.u32 255, 127
    %s25 = sand.u32 %s24, 85
    %s26 = sshrl.u32 %s25, 1
    %s27 = sor.u32 %s25, %s26
    %s28 = sand.u32 51, %s27
    %s29 = sshrl.u32 %s28, 2
    %s30 = sor.u32 %s28, %s29
    %s31 = sand.u32 15, %s30
    %v32 = vld [vmem:[%s1] sm:%s31]
    %v33 = vunpack.c.l.bf16 %v32
    %v34 = vunpack.c.h.bf16 %v32
    %v35 = vlaneseq
    %v36 = vand.u32 %v35, 127
    %vm38 = vcmp.lt.s32.totalorder %v36, 32
    %v39 = vsel %vm38, %v33, %v11
    %v40 = vpack.c.bf16 0.0, %v39
    %s42 = ssub.s32 16, 1
    %43 = vst [vmem:[#allocation14] sm:%s42] %v40
    %s44 = scalar_lea.vmem %s1, 4
    %s46 = sor.u32 255, 127
    %s47 = sand.u32 %s46, 85
    %s48 = sshrl.u32 %s47, 1
    %s49 = sor.u32 %s47, %s48
    %s50 = sand.u32 51, %s49
    %s51 = sshrl.u32 %s50, 2
    %s52 = sor.u32 %s50, %s51
    %s53 = sand.u32 15, %s52
    %v54 = vld [vmem:[%s44] sm:%s53]
    %v55 = vunpack.c.l.bf16 %v54
    %v56 = vunpack.c.h.bf16 %v54
    %v57 = vlaneseq
    %v58 = vand.u32 %v57, 127
    %vm60 = vcmp.lt.s32.totalorder %v58, 32
    %v61 = vsel %vm60, %v55, %v11
    %s62 = scalar_lea.vmem [#allocation14], 4
    %v63 = vpack.c.bf16 0.0, %v61
    %s65 = ssub.s32 16, 1
    %66 = vst [vmem:[%s62] sm:%s65] %v63
    %s67 = scalar_lea.vmem %s1, 8
    %s69 = sor.u32 255, 127
    %s70 = sand.u32 %s69, 85
    %s71 = sshrl.u32 %s70, 1
    %s72 = sor.u32 %s70, %s71
    %s73 = sand.u32 51, %s72
    %s74 = sshrl.u32 %s73, 2
    %s75 = sor.u32 %s73, %s74
    %s76 = sand.u32 15, %s75
    %v77 = vld [vmem:[%s67] sm:%s76]
    %v78 = vunpack.c.l.bf16 %v77
    %v79 = vunpack.c.h.bf16 %v77
    %v80 = vlaneseq
    %v81 = vand.u32 %v80, 127
    %vm83 = vcmp.lt.s32.totalorder %v81, 32
    %v84 = vsel %vm83, %v78, %v11
    %s85 = scalar_lea.vmem [#allocation14], 8
    %v86 = vpack.c.bf16 0.0, %v84
    %s88 = ssub.s32 16, 1
    %89 = vst [vmem:[%s85] sm:%s88] %v86
    %s90 = scalar_lea.vmem %s1, 12
    %s92 = sor.u32 255, 127
    %s93 = sand.u32 %s92, 85
    %s94 = sshrl.u32 %s93, 1
    %s95 = sor.u32 %s93, %s94
    %s96 = sand.u32 51, %s95
    %s97 = sshrl.u32 %s96, 2
    %s98 = sor.u32 %s96, %s97
    %s99 = sand.u32 15, %s98
    %v100 = vld [vmem:[%s90] sm:%s99]
    %v101 = vunpack.c.l.bf16 %v100
    %v102 = vunpack.c.h.bf16 %v100
    %v103 = vlaneseq
    %v104 = vand.u32 %v103, 127
    %vm106 = vcmp.lt.s32.totalorder %v104, 32
    %v107 = vsel %vm106, %v101, %v11
    %s108 = scalar_lea.vmem [#allocation14], 12
    %v109 = vpack.c.bf16 0.0, %v107
    %s111 = ssub.s32 16, 1
    %112 = vst [vmem:[%s108] sm:%s111] %v109
    %s113 = scalar_lea.vmem %s1, 16
    %s115 = sor.u32 255, 127
    %s116 = sand.u32 %s115, 85
    %s117 = sshrl.u32 %s116, 1
    %s118 = sor.u32 %s116, %s117
    %s119 = sand.u32 51, %s118
    %s120 = sshrl.u32 %s119, 2
    %s121 = sor.u32 %s119, %s120
    %s122 = sand.u32 15, %s121
    %v123 = vld [vmem:[%s113] sm:%s122]
    %v124 = vunpack.c.l.bf16 %v123
    %v125 = vunpack.c.h.bf16 %v123
    %v126 = vlaneseq
    %v127 = vand.u32 %v126, 127
    %vm129 = vcmp.lt.s32.totalorder %v127, 32
    %v130 = vsel %vm129, %v124, %v11
    %s131 = scalar_lea.vmem [#allocation14], 16
    %v132 = vpack.c.bf16 0.0, %v130
    %s134 = ssub.s32 16, 1
    %135 = vst [vmem:[%s131] sm:%s134] %v132
    %s136 = scalar_lea.vmem %s1, 20
    %s138 = sor.u32 255, 127
    %s139 = sand.u32 %s138, 85
    %s140 = sshrl.u32 %s139, 1
    %s141 = sor.u32 %s139, %s140
    %s142 = sand.u32 51, %s141
    %s143 = sshrl.u32 %s142, 2
    %s144 = sor.u32 %s142, %s143
    %s145 = sand.u32 15, %s144
    %v146 = vld [vmem:[%s136] sm:%s145]
    %v147 = vunpack.c.l.bf16 %v146
    %v148 = vunpack.c.h.bf16 %v146
    %v149 = vlaneseq
    %v150 = vand.u32 %v149, 127
    %vm152 = vcmp.lt.s32.totalorder %v150, 32
    %v153 = vsel %vm152, %v147, %v11
    %s154 = scalar_lea.vmem [#allocation14], 20
    %v155 = vpack.c.bf16 0.0, %v153
    %s157 = ssub.s32 16, 1
    %158 = vst [vmem:[%s154] sm:%s157] %v155
    %s159 = scalar_lea.vmem %s1, 24
    %s161 = sor.u32 255, 127
    %s162 = sand.u32 %s161, 85
    %s163 = sshrl.u32 %s162, 1
    %s164 = sor.u32 %s162, %s163
    %s165 = sand.u32 51, %s164
    %s166 = sshrl.u32 %s165, 2
    %s167 = sor.u32 %s165, %s166
    %s168 = sand.u32 15, %s167
    %v169 = vld [vmem:[%s159] sm:%s168]
    %v170 = vunpack.c.l.bf16 %v169
    %v171 = vunpack.c.h.bf16 %v169
    %v172 = vlaneseq
    %v173 = vand.u32 %v172, 127
    %vm175 = vcmp.lt.s32.totalorder %v173, 32
    %v176 = vsel %vm175, %v170, %v11
    %s177 = scalar_lea.vmem [#allocation14], 24
    %v178 = vpack.c.bf16 0.0, %v176
    %s180 = ssub.s32 16, 1
    %181 = vst [vmem:[%s177] sm:%s180] %v178
    %s182 = scalar_lea.vmem %s1, 28
    %s184 = sor.u32 255, 127
    %s185 = sand.u32 %s184, 85
    %s186 = sshrl.u32 %s185, 1
    %s187 = sor.u32 %s185, %s186
    %s188 = sand.u32 51, %s187
    %s189 = sshrl.u32 %s188, 2
    %s190 = sor.u32 %s188, %s189
    %s191 = sand.u32 15, %s190
    %v192 = vld [vmem:[%s182] sm:%s191]
    %v193 = vunpack.c.l.bf16 %v192
    %v194 = vunpack.c.h.bf16 %v192
    %v195 = vlaneseq
    %v196 = vand.u32 %v195, 127
    %vm198 = vcmp.lt.s32.totalorder %v196, 32
    %v199 = vsel %vm198, %v193, %v11
    %s200 = scalar_lea.vmem [#allocation14], 28
    %v201 = vpack.c.bf16 0.0, %v199
    %s203 = ssub.s32 16, 1
    %204 = vst [vmem:[%s200] sm:%s203] %v201
    %v205 = vld [vmem:[%s3] sm:$0x1]
    %v206 = vlaneseq
    %vm208 = vcmp.lt.s32.totalorder %v206, 32
    %v209 = vsel %vm208, %v205, %v15
    %s211 = ssub.s32 2, 1
    %212 = vst [vmem:[#allocation15] sm:%s211] %v209
    %v214 = vld [vmem:[%s0] sm:$0xf]
    %v215 = vld [vmem:[%s0 + $0x4] sm:$0xf]
    %v216 = vld [vmem:[%s0 + $0x8] sm:$0xf]
    %v217 = vld [vmem:[%s0 + $0xc] sm:$0xf]
    %v218 = vld [vmem:[#allocation14] sm:$0xf]
    %v219 = vld [vmem:[#allocation14 + $0x4] sm:$0xf]
    %v220 = vld [vmem:[#allocation14 + $0x8] sm:$0xf]
    %v221 = vld [vmem:[#allocation14 + $0xc] sm:$0xf]
    %v222 = vld [vmem:[#allocation14 + $0x10] sm:$0xf]
    %v223 = vld [vmem:[#allocation14 + $0x14] sm:$0xf]
    %v224 = vld [vmem:[#allocation14 + $0x18] sm:$0xf]
    %v225 = vld [vmem:[#allocation14 + $0x1c] sm:$0xf]
    %v226 = vld [vmem:[#allocation15] sm:$0x1]
    %v228 = vlaneseq
    %v229 = vshrl.u32 %v228, 7
    %v230 = vsub.s32 0, %v229
    %v231 = vrot.slane %v226, %v230
    %v237 = vunpack.c.l.b16 %v214
    %v238 = vunpack.c.l.b16 %v215
    %v239 = vunpack.c.l.b16 %v216
    %v240 = vunpack.c.l.b16 %v217
    %v241 = vpack.c.b16 %v238, %v237
    %v242 = vpack.c.b16 %v240, %v239
    %v251 = vunpack.c.l.b16 %v218
    %v252 = vunpack.c.l.b16 %v219
    %v253 = vunpack.c.l.b16 %v220
    %v254 = vunpack.c.l.b16 %v221
    %v255 = vunpack.c.l.b16 %v222
    %v256 = vunpack.c.l.b16 %v223
    %v257 = vunpack.c.l.b16 %v224
    %v258 = vunpack.c.l.b16 %v225
    %v259 = vpack.c.b16 %v252, %v251
    %v260 = vpack.c.b16 %v254, %v253
    %v261 = vpack.c.b16 %v256, %v255
    %v262 = vpack.c.b16 %v258, %v257
    %vm267 = vcmask 523264
    %v269 = vsel %vm267, %v241, 0
    %v272 = vsel %vm267, %v242, 0
    %274 = vmatprep.subr.bf16.mxu0 0
    %275 = vmatpush1.bf16.msra.mxu0 0
    %276 = vmatprep.subr.bf16.mxu0 0
    %277 = vmatpush1.bf16.msra.mxu0 0
    %278 = vmatprep.subr.bf16.mxu0 0
    %279 = vmatpush1.bf16.msra.mxu0 0
    %280 = vmatprep.subr.bf16.mxu0 0
    %281 = vmatpush1.bf16.msra.mxu0 0
    %282 = vmatprep.subr.bf16.mxu0 0
    %283 = vmatpush1.bf16.msra.mxu0 %v262
    %284 = vmatprep.subr.bf16.mxu0 0
    %285 = vmatpush1.bf16.msra.mxu0 %v261
    %286 = vmatprep.subr.bf16.mxu0 0
    %287 = vmatpush1.bf16.msra.mxu0 %v260
    %288 = vmatprep.subr.bf16.mxu0 0
    %289 = vmatpush1.bf16.msra.mxu0 %v259
    %290 = vmatprep.subr.bf16.mxu0 0
    %291 = vmatpush2.bf16.msra.mxu0 0
    %292 = vmatprep.subr.bf16.mxu0 0
    %293 = vmatpush2.bf16.msra.mxu0 0
    %294 = vmatprep.subr.bf16.mxu0 0
    %295 = vmatpush2.bf16.msra.mxu0 0
    %296 = vmatprep.subr.bf16.mxu0 0
    %297 = vmatpush2.bf16.msra.mxu0 0
    %298 = vmatprep.subr.bf16.mxu0 0
    %299 = vmatpush2.bf16.msra.mxu0 0
    %300 = vmatprep.subr.bf16.mxu0 0
    %301 = vmatpush2.bf16.msra.mxu0 0
    %302 = vmatprep.subr.bf16.mxu0 0
    %303 = vmatpush2.bf16.msra.mxu0 0
    %304 = vmatprep.subr.bf16.mxu0 0
    %305 = vmatpush2.bf16.msra.mxu0 0
    %306 = vmatprep.mubr.bf16.mxu0 0
    %307 = vmatmul.mubr.bf16.gmra.mxu0 %v269
    %v308 = vpop.f32.mrf.mxu0
    %v309 = vadd.f32 %v231, %v308
    %v310 = vpop.f32.mrf.mxu0
    %v311 = vpop.f32.mrf.mxu0
    %v312 = vadd.f32 %v231, %v311
    %v313 = vpop.f32.mrf.mxu0
    %314 = vmatprep.mubr.bf16.mxu0 0
    %315 = vmatmul.mubr.bf16.gmra.mxu0 %v272
    %v316 = vpop.f32.mrf.mxu0
    %v317 = vadd.f32 %v231, %v316
    %v318 = vpop.f32.mrf.mxu0
    %v319 = vpop.f32.mrf.mxu0
    %v320 = vadd.f32 %v231, %v319
    %v321 = vpop.f32.mrf.mxu0
    %322 = vdwg.mxu0
    %323 = vst [vmem:[#allocation12] sm:$0xff] %v309
    %324 = vst [vmem:[#allocation12 + $0x8] sm:$0xff] %v312
    %325 = vst [vmem:[#allocation12 + $0x10] sm:$0xff] %v317
    %326 = vst [vmem:[#allocation12 + $0x18] sm:$0xff] %v320
    // Predicated region
    $region14: #{patch_embedding.2} parent=1 // pred_check
      _
    $region15: #{patch_embedding.2} parent=1 // pred_check_branch
      %328 = sbr.rel (0) target = $region17
    $region16: #{patch_embedding.2} parent=1 // pred_region
      %s330 = ssub.s32 512, 512
      %331 = vsyncadd [#allocation13], %s330
      %s332 = sshll.u32 [#allocation12], 4
      %s333 = int_to_ptr.vmem [resolvable:$true] %s332
      %338 = dma.vmem_to_hbm [thread:$0]  %s333, 512, %s5, [#allocation13], 128, 128, 8
    $region17: #{patch_embedding.2} parent=1 // pred_fallthru
      _
    // Predicated region
    $region18: #{patch_embedding.2} parent=1 // pred_check
      _
    $region19: #{patch_embedding.2} parent=1 // pred_check_branch
      %340 = sbr.rel (0) target = $region21
    $region20: #{patch_embedding.2} parent=1 // pred_region
      %341 = dma.done [#allocation13], 512
    $region21: #{patch_embedding.2} parent=1 // pred_fallthru
      _
    %342 = vsyncpa [#allocation13], 1

</llo_original>
